<compile_context>
chip_gen: v6e
topology: v6e:2x2x1
jax: 0.10.0
libtpu: 0.0.40
codegen_flags: <defaults>
</compile_context>

<pallas_src>
import functools

import jax
import jax.numpy as jnp
from jax.experimental import pallas as pl
from jax.experimental.pallas import tpu as pltpu


def _layernorm2d_kernel(x_ref, wb_ref, o_ref, *, eps, inv_c):
    # x_ref:  (TILE_N, C, TILE_HW) in the caller's dtype (one slab of batch x spatial).
    # wb_ref: (C, 2) f32 -- column 0 = weight, column 1 = bias.
    # All statistics are per (n, spatial-column) over the channel (sublane) axis only, so
    # garbage rows/columns of a partial edge block never leak into real (unmasked) output.
    x = x_ref[...].astype(jnp.float32)
    s1 = jnp.sum(x, axis=1, keepdims=True)               # (TILE_N, 1, TILE_HW)
    s2 = jnp.sum(x * x, axis=1, keepdims=True)
    u = s1 * inv_c                                       # mean over channels
    var = jnp.maximum(s2 * inv_c - u * u, 0.0)           # biased variance (one-pass, f32)
    inv = jax.lax.rsqrt(var + eps)
    wb = wb_ref[...]                                     # (C, 2) f32
    w = wb[:, 0:1][None, :, :]                           # (1, C, 1)
    b = wb[:, 1:2][None, :, :]                           # (1, C, 1)
    o_ref[...] = ((x - u) * inv * w + b).astype(o_ref.dtype)


def _round_up(x, m):
    return (x + m - 1) // m * m


def _vmem_capacity_bytes():
    try:
        return int(pltpu.get_tpu_info().vmem_capacity_bytes)
    except Exception:
        return 64 << 20  # conservative default (v7x-sized)


def _select_tiles(N, C, HW, itemsize, target_bytes):
    """Pick (tile_n, tile_hw): lane-dense (multiple-of-128) spatial tile sized purely by
    bytes; if HW is small, block over batch elements so each grid step is multi-MiB."""
    col_bytes = max(C * itemsize, 1)                     # one spatial column of one image
    max_lanes = max(128, (target_bytes // col_bytes) // 128 * 128)
    hw_lanes = _round_up(HW, 128)
    if hw_lanes <= max_lanes:
        tile_hw = hw_lanes                               # whole spatial extent in one tile
        tile_n = max(1, min(N, target_bytes // max(col_bytes * tile_hw, 1)))
    else:
        tile_hw = int(max_lanes)
        tile_n = 1
    return int(tile_n), int(tile_hw)


def layernorm2d(x, weight, bias, eps=1e-6):
    """x: (N, C, H, W); weight, bias: (C,). Returns (N, C, H, W) in x.dtype."""
    N, C, H, W = x.shape
    HW = H * W
    itemsize = jnp.dtype(x.dtype).itemsize

    # Generation-aware sizing: v5e/v6e have 128 MiB physical VMEM, v7x has 64 MiB.
    vmem_cap = _vmem_capacity_bytes()
    big_vmem = vmem_cap >= (100 << 20)
    target_bytes = (8 << 20) if big_vmem else (3 << 20)  # one x tile, in the io dtype
    vmem_cap_limit = (96 << 20) if big_vmem else (48 << 20)

    tile_n, tile_hw = _select_tiles(N, C, HW, itemsize, target_bytes)

    # Ensure >= 2 grid steps when there is anything to split (keeps both v7x TCs busy).
    if pl.cdiv(N, tile_n) * pl.cdiv(HW, tile_hw) < 2:
        if N >= 2:
            tile_n = pl.cdiv(N, 2)
        elif HW > 128:
            tile_hw = max(128, _round_up(pl.cdiv(HW, 2), 128))

    grid = (pl.cdiv(N, tile_n), pl.cdiv(HW, tile_hw))

    x2 = x.reshape(N, C, HW)
    wb = jnp.stack([weight, bias], axis=1).astype(jnp.float32)   # (C, 2), cast once here

    # VMEM budget: double-buffered in + out tiles (io dtype) + ~3 full-tile f32
    # temporaries inside the kernel + resident params + margin; capped per generation.
    block_bytes = tile_n * C * tile_hw * itemsize
    f32_block_bytes = tile_n * C * tile_hw * 4
    param_bytes = max(C, 8) * 128 * 4
    needed = 4 * block_bytes + 3 * f32_block_bytes + param_bytes + (1 << 20)
    vmem_limit = int(min(max(needed, 8 << 20), vmem_cap_limit))

    out = pl.pallas_call(
        functools.partial(_layernorm2d_kernel, eps=float(eps), inv_c=1.0 / C),
        out_shape=jax.ShapeDtypeStruct((N, C, HW), x.dtype),
        grid=grid,
        in_specs=[
            pl.BlockSpec((tile_n, C, tile_hw), lambda n, t: (n, 0, t)),
            pl.BlockSpec((C, 2), lambda n, t: (0, 0)),
        ],
        out_specs=pl.BlockSpec((tile_n, C, tile_hw), lambda n, t: (n, 0, t)),
        compiler_params=pltpu.CompilerParams(
            dimension_semantics=("parallel", "parallel"),
            vmem_limit_bytes=vmem_limit,
        ),
    )(x2, wb)

    return out.reshape(N, C, H, W)


def _reference(x, weight, bias, eps=1e-6):
    xf = x.astype(jnp.float32)
    u = jnp.mean(xf, axis=1, keepdims=True)
    s = jnp.mean((xf - u) ** 2, axis=1, keepdims=True)
    y = (xf - u) / jnp.sqrt(s + eps)
    out = weight[None, :, None, None].astype(jnp.float32) * y \
        + bias[None, :, None, None].astype(jnp.float32)
    return out.astype(x.dtype)


if __name__ == "__main__":
    key = jax.random.PRNGKey(0)

    # Test 1: small f32 case, HW already lane-aligned (16*16 = 256).
    N, C, H, W = 2, 4, 16, 16
    x = jax.random.normal(key, (N, C, H, W), dtype=jnp.float32)
    weight = jnp.ones((C,), dtype=jnp.float32)   # matches nn.Parameter(torch.ones(C))
    bias = jnp.zeros((C,), dtype=jnp.float32)    # matches nn.Parameter(torch.zeros(C))

    out = jax.block_until_ready(layernorm2d(x, weight, bias, eps=1e-6))
    ref = _reference(x, weight, bias, eps=1e-6)
    assert out.shape == (N, C, H, W)
    assert jnp.allclose(out, ref, atol=1e-5, rtol=1e-5)

    # Test 2: non-128-multiple HW (10*10 = 100) exercises the partial-block masking path,
    # with non-trivial affine parameters.
    key1, key2, key3 = jax.random.split(jax.random.PRNGKey(0), 3)
    N2, C2, H2, W2 = 2, 4, 10, 10
    x2 = jax.random.normal(key1, (N2, C2, H2, W2), dtype=jnp.float32)
    w2 = jax.random.normal(key2, (C2,), dtype=jnp.float32)
    b2 = jax.random.normal(key3, (C2,), dtype=jnp.float32)

    out2 = jax.block_until_ready(layernorm2d(x2, w2, b2, eps=1e-6))
    ref2 = _reference(x2, w2, b2, eps=1e-6)
    assert out2.shape == (N2, C2, H2, W2)
    assert jnp.allclose(out2, ref2, atol=1e-5, rtol=1e-5)

    # Test 3: bf16 I/O (narrow-dtype HBM traffic), f32 stats inside the kernel.
    xb = x.astype(jnp.bfloat16)
    outb = jax.block_until_ready(layernorm2d(xb, weight, bias, eps=1e-6))
    refb = _reference(xb, weight, bias, eps=1e-6)
    assert outb.dtype == jnp.bfloat16
    assert jnp.allclose(outb.astype(jnp.float32), refb.astype(jnp.float32),
                        atol=3e-2, rtol=3e-2)

    print("KERNEL_OK")
</pallas_src>

<mosaic_0001>
module attributes {stable_mosaic.version = 11 : i64} {
  func.func @_layernorm2d_kernel(%arg0: i32, %arg1: i32, %arg2: memref<1x4x256xf32, #tpu.memory_space<vmem>>, %arg3: memref<4x2xf32, #tpu.memory_space<vmem>>, %arg4: memref<1x4x256xf32, #tpu.memory_space<vmem>>) attributes {dimension_semantics = [#tpu.dimension_semantics<parallel>, #tpu.dimension_semantics<parallel>], iteration_bounds = array<i64: 2, 1>, scalar_prefetch = 0 : i64, scratch_operands = 0 : i64, tpu.core_type = #tpu.core_type<tc>, window_params = [{transform_indices = @transform_0, window_bounds = array<i64: 1, 4, 256>}, {pipeline_mode = #tpu.pipeline_mode<synchronous>, transform_indices = @transform_1, window_bounds = array<i64: 4, 2>}, {transform_indices = @transform_2, window_bounds = array<i64: 1, 4, 256>}]} {
    %c0 = arith.constant 0 : index
    %c0_0 = arith.constant 0 : index
    %c0_1 = arith.constant 0 : index
    %0 = vector.load %arg2[%c0, %c0_0, %c0_1] : memref<1x4x256xf32, #tpu.memory_space<vmem>>, vector<1x4x256xf32>
    %cst = arith.constant dense<0.000000e+00> : vector<1x256xf32>
    %1 = vector.multi_reduction <add>, %0, %cst [1] : vector<1x4x256xf32> to vector<1x256xf32>
    %2 = vector.shape_cast %1 : vector<1x256xf32> to vector<1x1x256xf32>
    %3 = arith.mulf %0, %0 : vector<1x4x256xf32>
    %cst_2 = arith.constant dense<0.000000e+00> : vector<1x256xf32>
    %4 = vector.multi_reduction <add>, %3, %cst_2 [1] : vector<1x4x256xf32> to vector<1x256xf32>
    %5 = vector.shape_cast %4 : vector<1x256xf32> to vector<1x1x256xf32>
    %cst_3 = arith.constant 2.500000e-01 : f32
    %6 = vector.broadcast %cst_3 : f32 to vector<1x1x256xf32>
    %7 = arith.mulf %2, %6 : vector<1x1x256xf32>
    %cst_4 = arith.constant 2.500000e-01 : f32
    %8 = vector.broadcast %cst_4 : f32 to vector<1x1x256xf32>
    %9 = arith.mulf %5, %8 : vector<1x1x256xf32>
    %10 = arith.mulf %7, %7 : vector<1x1x256xf32>
    %11 = arith.subf %9, %10 : vector<1x1x256xf32>
    %cst_5 = arith.constant 0.000000e+00 : f32
    %12 = vector.broadcast %cst_5 : f32 to vector<1x1x256xf32>
    %13 = arith.maximumf %11, %12 : vector<1x1x256xf32>
    %cst_6 = arith.constant 9.99999997E-7 : f32
    %14 = vector.broadcast %cst_6 : f32 to vector<1x1x256xf32>
    %15 = arith.addf %13, %14 : vector<1x1x256xf32>
    %16 = math.rsqrt %15 : vector<1x1x256xf32>
    %c0_7 = arith.constant 0 : index
    %c0_8 = arith.constant 0 : index
    %17 = vector.load %arg3[%c0_7, %c0_8] : memref<4x2xf32, #tpu.memory_space<vmem>>, vector<4x2xf32>
    %18 = vector.extract_strided_slice %17 {offsets = [0, 0], sizes = [4, 1], strides = [1, 1]} : vector<4x2xf32> to vector<4x1xf32>
    %19 = vector.shape_cast %18 : vector<4x1xf32> to vector<1x4x1xf32>
    %20 = vector.extract_strided_slice %17 {offsets = [0, 1], sizes = [4, 1], strides = [1, 1]} : vector<4x2xf32> to vector<4x1xf32>
    %21 = vector.shape_cast %20 : vector<4x1xf32> to vector<1x4x1xf32>
    %22 = vector.broadcast %7 : vector<1x1x256xf32> to vector<1x4x256xf32>
    %23 = arith.subf %0, %22 : vector<1x4x256xf32>
    %24 = vector.broadcast %16 : vector<1x1x256xf32> to vector<1x4x256xf32>
    %25 = arith.mulf %23, %24 : vector<1x4x256xf32>
    %26 = vector.broadcast %19 : vector<1x4x1xf32> to vector<1x4x256xf32>
    %27 = arith.mulf %25, %26 : vector<1x4x256xf32>
    %28 = vector.broadcast %21 : vector<1x4x1xf32> to vector<1x4x256xf32>
    %29 = arith.addf %27, %28 : vector<1x4x256xf32>
    %c0_9 = arith.constant 0 : index
    %c0_10 = arith.constant 0 : index
    %c0_11 = arith.constant 0 : index
    %30 = vector.load %arg4[%c0_9, %c0_10, %c0_11] : memref<1x4x256xf32, #tpu.memory_space<vmem>>, vector<1x4x256xf32>
    tpu.vector_store %arg4[%c0_9, %c0_10, %c0_11], %29 {strides = array<i32>} : memref<1x4x256xf32, #tpu.memory_space<vmem>>, vector<1x4x256xf32>,
    return
  }
  func.func @transform_0(%arg0: i32, %arg1: i32) -> (i32, i32, i32) {
    %c0_i32 = arith.constant 0 : i32
    %c0_i32_0 = arith.constant 0 : i32
    return %arg0, %c0_i32, %arg1 : i32, i32, i32
  }
  func.func @transform_1(%arg0: i32, %arg1: i32) -> (i32, i32) {
    %c0_i32 = arith.constant 0 : i32
    %c0_i32_0 = arith.constant 0 : i32
    %c0_i32_1 = arith.constant 0 : i32
    return %c0_i32, %c0_i32_0 : i32, i32
  }
  func.func @transform_2(%arg0: i32, %arg1: i32) -> (i32, i32, i32) {
    %c0_i32 = arith.constant 0 : i32
    %c0_i32_0 = arith.constant 0 : i32
    return %arg0, %c0_i32, %arg1 : i32, i32, i32
  }
}

</mosaic_0001>

<llo_original>
// kernel: tpu_custom_call.1
$region0: #{tpu_custom_call.1}
  #allocation0 [shape = 'u32[]', space=smem, size = 0x4, offset = 0x4, fixed_abs, tag = 'smem constant byte address 0x4 - core index']
  #allocation1 [shape = 'u32[144,128]{1,0:T(1,128)}', space=vmem, size = 0x12000, scoped, tag = 'internal scratch']
  %s0 = inlined_call_operand.hbm [shape: f32[2,4,256], index: 0, kind: input, shape index: {}]
  %s1 = inlined_call_operand.vmem [shape: f32[4,2], index: 1, kind: input, shape index: {}]
  %s2 = inlined_call_operand.hbm [shape: f32[2,4,256], index: 2, kind: output, shape index: {}]
  %s3 = sld [smem:[#allocation0]]
  $region45: #{tpu_custom_call.1} parent=0
    _
  %s5 = ssub.s32 1, %s3
  %s6 = scalar_select 0, %s5, %s3
  $region1: #{tpu_custom_call.1} parent=0
    #allocation2 [shape = 'u8[8192]{0}', space=vmem, size = 0x2000, scoped, tag = 'input window, operand 0']
    #allocation3 [shape = 's32[2]{0}', space=sflag, size = 0x8, scoped, tag = 'scoped memory for tpu_custom_call.1']
    #allocation4 [shape = 's32[2]{0}', space=sflag, size = 0x8, scoped, tag = 'scoped memory for tpu_custom_call.1']
    #allocation5 [shape = 'u8[8192]{0}', space=vmem, size = 0x2000, scoped, tag = 'output window, operand 0']
    %7 = vsyncpa [#allocation3], 0
    %s8 = scalar_lea.sflag [#allocation3], 1
    %9 = vsyncpa %s8, 0
    %10 = vsyncpa [#allocation4], 0
    %s11 = scalar_lea.sflag [#allocation4], 1
    %12 = vsyncpa %s11, 0
    loop: start=0, step=1, limit=4
    $region2: #{tpu_custom_call.1} parent=1 // loop_pre_header
      _
    $region3: #{tpu_custom_call.1} parent=1 // loop_header
      %s14 = sphi 0, %s18
      %p15 = scmp.ge.s32.totalorder %s14, 4
      %s21 = sphi 0, %s33
      %s22 = sphi 0, %s29
      %s23 = sphi 0, %s21
      %s24 = sphi 0, %s22
      %s25 = sphi 0, %s23
      %s26 = sphi 0, %s24
      %s38 = sphi 0, %s40
      %s41 = sphi 0, %s38
      %s42 = sphi 0, %s41
      %s58 = sphi 0, %s42
      %s62 = sphi 0, %s62
      %s64 = sphi 0, %s62
      %s65 = sphi 0, %s64
      %s79 = sphi 0, %s65
      %s87 = sphi 0, %s89
      %s90 = sphi 0, %s87
      %s91 = sphi 0, %s90
      %s107 = sphi 0, %s91
    $region4: #{tpu_custom_call.1} parent=1 // loop_header_branch
      %17 = sbr.rel (%p15) target = $region8
    $region5: #{tpu_custom_call.1} parent=1 // loop_body
      %s19 = ssub.s32 %s14, 1
      %s20 = ssub.s32 %s14, 2
      %s27 = sadd.s32 1, %s22
      %p28 = scmp.ge.s32.totalorder %s27, 1
      %s29 = scalar_select %p28, 0, %s27
      %s30 = sadd.s32 1, %s21
      %s31 = scalar_select %p28, %s30, %s21
      %p32 = scmp.ge.s32.totalorder %s31, 2
      %s33 = scalar_select %p32, 0, %s31
      %s34 = ssub.s32 %s21, %s33
      %s35 = ssub.s32 %s22, %s29
      %s36 = sor.u32 %s34, %s35
      %p37 = scmp.eq.s32.totalorder %s36, 0
      %s39 = sadd.s32 %s38, 1
      %s40 = scalar_select %p37, %s38, %s39
      %p43 = pneg %p37
      %p44 = scmp.eq.s32.totalorder %s14, 1
      %p45 = por %p43, %p44
      %p46 = scmp.ne.s32.totalorder %s38, %s41
      %p47 = scmp.eq.s32.totalorder %s14, 0
      %p48 = por %p46, %p47
      %p49 = scmp.ne.s32.totalorder %s38, %s41
      %p50 = scmp.eq.s32.totalorder %s19, 1
      %p51 = por %p49, %p50
      %p52 = scmp.ne.s32.totalorder %s41, %s42
      %p53 = scmp.eq.s32.totalorder %s19, 0
      %p54 = por %p52, %p53
      %p55 = scmp.ne.s32.totalorder %s41, %s42
      %p56 = scmp.eq.s32.totalorder %s20, 1
      %p57 = por %p55, %p56
      %p59 = scmp.ne.s32.totalorder %s42, %s58
      %p60 = scmp.eq.s32.totalorder %s20, 0
      %p61 = por %p59, %p60
      %s63 = sadd.s32 %s62, 1
      %p66 = scmp.eq.s32.totalorder %s14, 1
      %p67 = scmp.ne.s32.totalorder %s62, %s64
      %p68 = scmp.eq.s32.totalorder %s14, 0
      %p69 = por %p67, %p68
      %p70 = scmp.ne.s32.totalorder %s62, %s64
      %p71 = scmp.eq.s32.totalorder %s19, 1
      %p72 = por %p70, %p71
      %p73 = scmp.ne.s32.totalorder %s64, %s65
      %p74 = scmp.eq.s32.totalorder %s19, 0
      %p75 = por %p73, %p74
      %p76 = scmp.ne.s32.totalorder %s64, %s65
      %p77 = scmp.eq.s32.totalorder %s20, 1
      %p78 = por %p76, %p77
      %p80 = scmp.ne.s32.totalorder %s65, %s79
      %p81 = scmp.eq.s32.totalorder %s20, 0
      %p82 = por %p80, %p81
      %s83 = ssub.s32 %s21, %s33
      %s84 = ssub.s32 %s22, %s29
      %s85 = sor.u32 %s83, %s84
      %p86 = scmp.eq.s32.totalorder %s85, 0
      %s88 = sadd.s32 %s87, 1
      %s89 = scalar_select %p86, %s87, %s88
      %p92 = pneg %p86
      %p93 = scmp.eq.s32.totalorder %s14, 1
      %p94 = por %p92, %p93
      %p95 = scmp.ne.s32.totalorder %s87, %s90
      %p96 = scmp.eq.s32.totalorder %s14, 0
      %p97 = por %p95, %p96
      %p98 = scmp.ne.s32.totalorder %s87, %s90
      %p99 = scmp.eq.s32.totalorder %s19, 1
      %p100 = por %p98, %p99
      %p101 = scmp.ne.s32.totalorder %s90, %s91
      %p102 = scmp.eq.s32.totalorder %s19, 0
      %p103 = por %p101, %p102
      %p104 = scmp.ne.s32.totalorder %s90, %s91
      %p105 = scmp.eq.s32.totalorder %s20, 1
      %p106 = por %p104, %p105
      %p108 = scmp.ne.s32.totalorder %s91, %s107
      %p109 = scmp.eq.s32.totalorder %s20, 0
      %p110 = por %p108, %p109
      %p111 = scmp.le.s32.totalorder 1, %s14
      %p112 = scmp.lt.s32.totalorder %s14, 3
      %p113 = pnand %p111, %p112
      %p114 = pneg %p113
      // Predicated region
      $region9: #{tpu_custom_call.1} parent=5 // pred_check
        _
      $region10: #{tpu_custom_call.1} parent=5 // pred_check_branch
        %116 = sbr.rel (%p113) target = $region12
      $region11: #{tpu_custom_call.1} parent=5 // pred_region
        %s117 = ssub.s32 %s14, 1
        // Predicated region
        $region13: #{tpu_custom_call.1} parent=11 // pred_check
          %p118 = pneg %p75
        $region14: #{tpu_custom_call.1} parent=11 // pred_check_branch
          %120 = sbr.rel (%p118) target = $region16
        $region15: #{tpu_custom_call.1} parent=11 // pred_region
          _
        $region16: #{tpu_custom_call.1} parent=11 // pred_fallthru
          _
      $region12: #{tpu_custom_call.1} parent=5 // pred_fallthru
        _
      %p121 = scmp.lt.s32.totalorder %s14, 2
      // Predicated region
      $region17: #{tpu_custom_call.1} parent=5 // pred_check
        %p122 = pneg %p121
      $region18: #{tpu_custom_call.1} parent=5 // pred_check_branch
        %124 = sbr.rel (%p122) target = $region20
      $region19: #{tpu_custom_call.1} parent=5 // pred_region
        // Predicated region
        $region21: #{tpu_custom_call.1} parent=19 // pred_check
          %p125 = pneg %p48
        $region22: #{tpu_custom_call.1} parent=19 // pred_check_branch
          %127 = sbr.rel (%p125) target = $region24
        $region23: #{tpu_custom_call.1} parent=19 // pred_region
          %s128 = sand.u32 %s38, 1
          %s129 = scalar_lea.sflag [#allocation3], %s128
          %s130 = sand.u32 %s38, 1
          %s131 = smul.addr %s130, 8
          %s132 = scalar_lea.vmem [#allocation2], %s131
          %s133 = smul.u32 2, %s22
          %s135 = ssub.s32 128, 128
          %136 = vsyncadd %s129, %s135
          %s137 = smul.addr %s21, 2
          %s138 = sadd.s32 %s133, %s137
          %s139 = smul.addr %s138, 64
          %s140 = scalar_lea.hbm %s0, %s139
          %s142 = sshll.u32 %s132, 4
          %s143 = int_to_ptr.vmem [resolvable:$true] %s142
          %145 = dma.hbm_to_vmem [thread:$0]  %s140, 128, %s143, %s129
        $region24: #{tpu_custom_call.1} parent=19 // pred_fallthru
          _
      $region20: #{tpu_custom_call.1} parent=5 // pred_fallthru
        _
      %p146 = scmp.le.s32.totalorder 1, %s14
      %p147 = scmp.lt.s32.totalorder %s14, 3
      %p148 = pnand %p146, %p147
      %p149 = pneg %p148
      // Predicated region
      $region25: #{tpu_custom_call.1} parent=5 // pred_check
        _
      $region26: #{tpu_custom_call.1} parent=5 // pred_check_branch
        %151 = sbr.rel (%p148) target = $region28
      $region27: #{tpu_custom_call.1} parent=5 // pred_region
        %s152 = ssub.s32 %s14, 1
        %s153 = sand.u32 %s41, 1
        %s154 = scalar_lea.sflag [#allocation3], %s153
        %s155 = sand.u32 %s41, 1
        %s156 = smul.addr %s155, 8
        %s157 = scalar_lea.vmem [#allocation2], %s156
        // Predicated region
        $region29: #{tpu_custom_call.1} parent=27 // pred_check
          %p158 = pneg %p54
        $region30: #{tpu_custom_call.1} parent=27 // pred_check_branch
          %160 = sbr.rel (%p158) target = $region32
        $region31: #{tpu_custom_call.1} parent=27 // pred_region
          %161 = dma.done %s154, 128
        $region32: #{tpu_custom_call.1} parent=27 // pred_fallthru
          _
        %s162 = sand.u32 %s41, 1
        %s163 = scalar_lea.sflag [#allocation3], %s162
        %s164 = sand.u32 %s41, 1
        %s165 = smul.addr %s164, 8
        %s166 = scalar_lea.vmem [#allocation2], %s165
        %p167 = pneg %p54
        %p168 = pneg %p51
        %p169 = pneg %p75
        %p170 = pneg %p72
        %p171 = pneg %p103
        %p172 = pneg %p100
        %s173 = sand.u32 %s90, 1
        %s174 = scalar_lea.sflag [#allocation4], %s173
        %s175 = sand.u32 %s90, 1
        %s176 = smul.addr %s175, 8
        %s177 = scalar_lea.vmem [#allocation5], %s176
        %s178 = smul.u32 2, %s24
        %s179 = smul.u32 2, %s24
        %v180 = vld [vmem:[%s157] sm:$0xff]
        %v182 = vcombine.high %v180, %v180
        %vm184 = vcmask 1043456
        %v185 = vsel %vm184, %v180, 0.0
        %v186 = vrot.slane %v185, 4
        %v187 = vadd.f32 %v185, %v186
        %v188 = vrot.slane %v187, 2
        %v189 = vadd.f32 %v187, %v188
        %v190 = vrot.slane %v189, 1
        %v191 = vadd.f32 %v189, %v190
        %v192 = vsel %vm184, %v182, 0.0
        %v193 = vrot.slane %v192, 4
        %v194 = vadd.f32 %v192, %v193
        %v195 = vrot.slane %v194, 2
        %v196 = vadd.f32 %v194, %v195
        %v197 = vrot.slane %v196, 1
        %v198 = vadd.f32 %v196, %v197
        %v199 = vmul.f32 %v180, %v180
        %v201 = vcombine.high %v199, %v199
        %v203 = vsel %vm184, %v199, 0.0
        %v204 = vrot.slane %v203, 4
        %v205 = vadd.f32 %v203, %v204
        %v206 = vrot.slane %v205, 2
        %v207 = vadd.f32 %v205, %v206
        %v208 = vrot.slane %v207, 1
        %v209 = vadd.f32 %v207, %v208
        %v210 = vsel %vm184, %v201, 0.0
        %v211 = vrot.slane %v210, 4
        %v212 = vadd.f32 %v210, %v211
        %v213 = vrot.slane %v212, 2
        %v214 = vadd.f32 %v212, %v213
        %v215 = vrot.slane %v214, 1
        %v216 = vadd.f32 %v214, %v215
        %v217 = vmul.f32 %v191, 0.25
        %v218 = vmul.f32 %v198, 0.25
        %v219 = vmul.f32 %v209, 0.25
        %v220 = vmul.f32 %v216, 0.25
        %v221 = vmul.f32 %v217, %v217
        %v222 = vmul.f32 %v218, %v218
        %v223 = vsub.f32 %v219, %v221
        %v224 = vsub.f32 %v220, %v222
        %v225 = vmax.f32 %v223, 0.0
        %v226 = vmax.f32 %v224, 0.0
        %v227 = vadd.f32 %v225, 1e-06
        %v228 = vadd.f32 %v226, 1e-06
        %v229 = vrsqrt.pop %v227
        %v230 = vrsqrt.pop %v228
        %v231 = vld [vmem:[%s1] sm:$0xf]
        %v234 = vcombine.low %v217, %v218
        %v236 = vsub.f32 %v180, %v234
        %v239 = vcombine.low %v229, %v230
        %v241 = vmul.f32 %v236, %v239
        %243 = vset.pattern.permute.xlu0 0
        %244 = vperm.xlu0 %243, %v231
        %v245 = vpop.permute.xlu0 %244
        %v247 = vunpack.c.l.s4 839922192
        %v248 = vunpack.c.0.s8 %v247
        %v249 = vlaneseq
        %v250 = vshrl.u32 %v249, 7
        %v251 = vsub.s32 %v248, %v250
        %v252 = vrot.slane %v245, %v251
        %v254 = vmul.f32 %v241, %v252
        %255 = vset.pattern.permute.xlu0 1
        %256 = vperm.xlu0 %255, %v231
        %v257 = vpop.permute.xlu0 %256
        %v259 = vunpack.c.l.s4 839922192
        %v260 = vunpack.c.0.s8 %v259
        %v261 = vlaneseq
        %v262 = vshrl.u32 %v261, 7
        %v263 = vsub.s32 %v260, %v262
        %v264 = vrot.slane %v257, %v263
        %v266 = vadd.f32 %v254, %v264
        %267 = vst [vmem:[%s177] sm:$0xff] %v266
        %s268 = sand.u32 %s90, 1
        %s269 = scalar_lea.sflag [#allocation4], %s268
        %s270 = sand.u32 %s90, 1
        %s271 = smul.addr %s270, 8
        %s272 = scalar_lea.vmem [#allocation5], %s271
        // Predicated region
        $region33: #{tpu_custom_call.1} parent=27 // pred_check
          %p273 = pneg %p100
        $region34: #{tpu_custom_call.1} parent=27 // pred_check_branch
          %275 = sbr.rel (%p273) target = $region36
        $region35: #{tpu_custom_call.1} parent=27 // pred_region
          %s276 = smul.u32 2, %s24
          %s278 = ssub.s32 128, 128
          %279 = vsyncadd %s269, %s278
          %s280 = smul.addr %s23, 2
          %s281 = sadd.s32 %s276, %s280
          %s282 = smul.addr %s281, 64
          %s283 = scalar_lea.hbm %s2, %s282
          %s285 = sshll.u32 %s272, 4
          %s286 = int_to_ptr.vmem [resolvable:$true] %s285
          %288 = dma.vmem_to_hbm [thread:$0]  %s286, 128, %s283, %s269
        $region36: #{tpu_custom_call.1} parent=27 // pred_fallthru
          _
      $region28: #{tpu_custom_call.1} parent=5 // pred_fallthru
        _
      %p289 = scmp.le.s32.totalorder 2, %s14
      // Predicated region
      $region37: #{tpu_custom_call.1} parent=5 // pred_check
        %p290 = pneg %p289
      $region38: #{tpu_custom_call.1} parent=5 // pred_check_branch
        %292 = sbr.rel (%p290) target = $region40
      $region39: #{tpu_custom_call.1} parent=5 // pred_region
        %s293 = ssub.s32 %s14, 2
        // Predicated region
        $region41: #{tpu_custom_call.1} parent=39 // pred_check
          %p294 = pneg %p106
        $region42: #{tpu_custom_call.1} parent=39 // pred_check_branch
          %296 = sbr.rel (%p294) target = $region44
        $region43: #{tpu_custom_call.1} parent=39 // pred_region
          %s297 = sand.u32 %s91, 1
          %s298 = scalar_lea.sflag [#allocation4], %s297
          %s299 = sand.u32 %s91, 1
          %s300 = smul.addr %s299, 8
          %s301 = scalar_lea.vmem [#allocation5], %s300
          %302 = dma.done %s298, 128
        $region44: #{tpu_custom_call.1} parent=39 // pred_fallthru
          _
      $region40: #{tpu_custom_call.1} parent=5 // pred_fallthru
        _
    $region6: #{tpu_custom_call.1} parent=1 // loop_footer
      %s18 = sadd.s32 1, %s14
    $region7: #{tpu_custom_call.1} parent=1 // loop_footer_branch
      %13 = sbr.rel target = $region3
    $region8: #{tpu_custom_call.1} parent=1 // loop_exit
      _
    %303 = vsyncpa [#allocation3], 1
    %s304 = scalar_lea.sflag [#allocation3], 1
    %305 = vsyncpa %s304, 1
    %306 = vsyncpa [#allocation4], 1
    %s307 = scalar_lea.sflag [#allocation4], 1
    %308 = vsyncpa %s307, 1

</llo_original>
